<compile_context>
chip_gen: v7x
topology: tpu7x:2x2x1
jax: 0.10.0
libtpu: 0.0.40
codegen_flags: <defaults>
</compile_context>

<pallas_src>
import functools
import math

import jax
import jax.numpy as jnp
from jax import lax
from jax.experimental import pallas as pl
from jax.experimental.pallas import tpu as pltpu

PI = 0.5
SIGMA_1 = math.exp(-0.0)
SIGMA_2 = math.exp(-6.0)
LOG_SQRT_2PI = math.log(math.sqrt(2.0 * math.pi))

# Pre-folded scale-mixture constants:  PI*N(v;0,S) = exp(LOG_C - 0.5*v^2/S^2)
_INV_VAR_1 = 1.0 / (SIGMA_1 * SIGMA_1)
_INV_VAR_2 = 1.0 / (SIGMA_2 * SIGMA_2)
_LOG_C1 = math.log(PI) - LOG_SQRT_2PI - math.log(SIGMA_1)
_LOG_C2 = math.log(1.0 - PI) - LOG_SQRT_2PI - math.log(SIGMA_2)

_MIB = 1024 * 1024


def _softplus(x):
    # Numerically-stable log1p(exp(x)); identical to the reference for x <= 0
    # (the module's rho init range) and safe for large positive rho.
    return jnp.maximum(x, 0.0) + jnp.log1p(jnp.exp(-jnp.abs(x)))


def _mixture_logprob_sum(val):
    # sum over elements of log( PI*N(val;0,SIGMA_1) + (1-PI)*N(val;0,SIGMA_2) )
    # computed as a log-sum-exp: hi + log1p(exp(lo - hi)).
    v2 = val * val
    a1 = _LOG_C1 - (0.5 * _INV_VAR_1) * v2
    a2 = _LOG_C2 - (0.5 * _INV_VAR_2) * v2
    hi = jnp.maximum(a1, a2)
    lo = jnp.minimum(a1, a2)
    return jnp.sum(hi + jnp.log1p(jnp.exp(lo - hi)))


def _bayesian_linear_kernel(x_ref, wmu_ref, wrho_ref, weps_ref,
                            bmu_ref, brho_ref, beps_ref,
                            y_ref, stats_ref,
                            acc_ref, sums_ref,
                            *, compute_log_probs):
    k = pl.program_id(1)
    k_last = pl.num_programs(1) - 1

    # ---- first K step: sample bias, init y accumulator, bias log-probs --------------
    @pl.when(k == 0)
    def _init():
        b_sigma = _softplus(brho_ref[...])                 # (1, bo)
        b_eps = beps_ref[...]
        b = bmu_ref[...] + b_sigma * b_eps                 # (1, bo)
        acc_ref[...] = jnp.broadcast_to(b, acc_ref.shape)  # F.linear bias term
        if compute_log_probs:
            n_b = b.shape[0] * b.shape[1]
            sums_ref[0] = _mixture_logprob_sum(b)
            sums_ref[1] = (-LOG_SQRT_2PI * n_b
                           - jnp.sum(jnp.log(b_sigma) + 0.5 * (b_eps * b_eps)))

    # ---- sample weight tile via the reparameterization trick (VPU/EUP) --------------
    w_eps = weps_ref[...]                                  # (bo, bk)
    w_sigma = _softplus(wrho_ref[...])                     # (bo, bk)
    w = wmu_ref[...] + w_sigma * w_eps                     # (bo, bk)

    # ---- y += x @ w.T, contracting both last dims (no in-kernel transpose of w) -----
    acc_ref[...] += lax.dot_general(
        x_ref[...], w,
        dimension_numbers=(((1,), (1,)), ((), ())),
        preferred_element_type=jnp.float32,
    )

    if compute_log_probs:
        n_w = w.shape[0] * w.shape[1]
        # variational posterior, fused single reduction (w - mu == sigma * eps)
        sums_ref[1] = sums_ref[1] + (
            -LOG_SQRT_2PI * n_w
            - jnp.sum(jnp.log(w_sigma) + 0.5 * (w_eps * w_eps)))
        # scale-mixture prior (log-sum-exp form)
        sums_ref[0] = sums_ref[0] + _mixture_logprob_sum(w)

    # ---- last K step: emit y tile and the per-out-tile log-prob partials ------------
    @pl.when(k == k_last)
    def _finalize():
        y_ref[...] = acc_ref[...].astype(y_ref.dtype)
        row = lax.broadcasted_iota(jnp.int32, stats_ref.shape[1:], 0)
        if compute_log_probs:
            # partial log_prior in sublane 0, partial log_var_post in sublane 1
            stats_ref[0] = jnp.where(
                row == 0, sums_ref[0],
                jnp.where(row == 1, sums_ref[1], 0.0))
        else:
            stats_ref[0] = jnp.zeros(stats_ref.shape[1:], jnp.float32)


def _tile_candidates(dim, unit=128, max_tile=2048):
    """Tile sizes: multiples of 128 dividing dim (lane-dense), else the full extent."""
    cands = [t for t in range(unit, min(dim, max_tile) + 1, unit) if dim % t == 0]
    return sorted(cands, reverse=True) if cands else [dim]


def _pipeline_vmem_bytes(batch, block_out, block_k):
    f32 = 4
    w_stream = 3 * 2 * block_out * block_k * f32   # mu/rho/eps tiles, double-buffered
    w_temps = 2 * block_out * block_k * f32        # sampled w + w_sigma temporaries
    x_stream = 2 * batch * block_k * f32           # x tile, double-buffered
    y_out = 2 * batch * block_out * f32            # y output block, double-buffered
    acc = batch * block_out * f32                  # VMEM f32 accumulator scratch
    b_stream = 3 * 2 * block_out * f32             # bias mu/rho/eps tiles
    stats = 2 * 8 * 128 * f32                      # per-tile log-prob slab
    return w_stream + w_temps + x_stream + y_out + acc + b_stream + stats


def _select_tiles(batch, in_features, out_features, vmem_budget_bytes):
    best = None
    for bo in _tile_candidates(out_features):
        for bk in _tile_candidates(in_features):
            if _pipeline_vmem_bytes(batch, bo, bk) > vmem_budget_bytes:
                continue
            score = (bo * bk, bo)
            if best is None or score > best[0]:
                best = (score, bo, bk)
    if best is None:
        # Nothing fits the budget; fall back to the smallest candidates and let the
        # raised vmem_limit / compiler buffering cope.
        return _tile_candidates(out_features)[-1], _tile_candidates(in_features)[-1]
    return best[1], best[2]


def bayesian_linear_forward(x, weight_mu, weight_rho, weight_eps,
                            bias_mu, bias_rho, bias_eps, *,
                            compute_log_probs=True,
                            block_out=None, block_k=None,
                            vmem_budget_bytes=40 * _MIB):
    """BayesianLinear forward (sample=True, calculate_log_probs=compute_log_probs).

    Returns (y, log_prior, log_variational_posterior).
    """
    batch, in_features = x.shape
    out_features = weight_mu.shape[0]

    auto_bo, auto_bk = _select_tiles(batch, in_features, out_features, vmem_budget_bytes)
    block_out = auto_bo if block_out is None else block_out
    block_k = auto_bk if block_k is None else block_k
    assert out_features % block_out == 0, "block_out must divide out_features"
    assert in_features % block_k == 0, "block_k must divide in_features"
    num_i = out_features // block_out
    num_k = in_features // block_k

    bias_mu2 = bias_mu.reshape(1, out_features)
    bias_rho2 = bias_rho.reshape(1, out_features)
    bias_eps2 = bias_eps.reshape(1, out_features)

    x_spec = pl.BlockSpec((batch, block_k), lambda i, k: (0, k))
    w_spec = pl.BlockSpec((block_out, block_k), lambda i, k: (i, k))
    b_spec = pl.BlockSpec((1, block_out), lambda i, k: (0, i))
    y_spec = pl.BlockSpec((batch, block_out), lambda i, k: (0, i))
    stats_spec = pl.BlockSpec((1, 8, 128), lambda i, k: (i, 0, 0))

    kernel = functools.partial(_bayesian_linear_kernel,
                               compute_log_probs=compute_log_probs)

    y, stats = pl.pallas_call(
        kernel,
        out_shape=(
            jax.ShapeDtypeStruct((batch, out_features), x.dtype),
            jax.ShapeDtypeStruct((num_i, 8, 128), jnp.float32),
        ),
        grid_spec=pltpu.PrefetchScalarGridSpec(
            num_scalar_prefetch=0,
            grid=(num_i, num_k),
            in_specs=[x_spec, w_spec, w_spec, w_spec, b_spec, b_spec, b_spec],
            out_specs=(y_spec, stats_spec),
            scratch_shapes=[
                pltpu.VMEM((batch, block_out), jnp.float32),  # y accumulator
                pltpu.SMEM((2,), jnp.float32),                # running [prior, posterior]
            ],
        ),
        compiler_params=pltpu.CompilerParams(
            # out-feature tiles are independent (megacore-shardable on v7x);
            # the K axis carries the resident accumulators -> reduction axis, last.
            dimension_semantics=("parallel", "arbitrary"),
            vmem_limit_bytes=int(vmem_budget_bytes + 12 * _MIB),
        ),
    )(x, weight_mu, weight_rho, weight_eps, bias_mu2, bias_rho2, bias_eps2)

    log_prior = jnp.sum(stats[:, 0, 0])
    log_var_post = jnp.sum(stats[:, 1, 0])
    return y, log_prior, log_var_post


def _reference_forward(x, weight_mu, weight_rho, weight_eps, bias_mu, bias_rho, bias_eps):
    # Direct transcription of the PyTorch module's math (naive forms).
    w_sigma = jnp.log1p(jnp.exp(weight_rho))
    w = weight_mu + w_sigma * weight_eps
    b_sigma = jnp.log1p(jnp.exp(bias_rho))
    b = bias_mu + b_sigma * bias_eps
    y = x @ w.T + b

    def gauss_lp(val, mu, sigma):
        return -LOG_SQRT_2PI - jnp.log(sigma) - (val - mu) ** 2 / (2.0 * sigma ** 2)

    def mix_lp(val):
        p1 = jnp.exp(-LOG_SQRT_2PI - math.log(SIGMA_1) - val ** 2 / (2.0 * SIGMA_1 ** 2))
        p2 = jnp.exp(-LOG_SQRT_2PI - math.log(SIGMA_2) - val ** 2 / (2.0 * SIGMA_2 ** 2))
        return jnp.log(PI * p1 + (1.0 - PI) * p2)

    log_var_post = (jnp.sum(gauss_lp(w, weight_mu, w_sigma))
                    + jnp.sum(gauss_lp(b, bias_mu, b_sigma)))
    log_prior = jnp.sum(mix_lp(w)) + jnp.sum(mix_lp(b))
    return y, log_prior, log_var_post


def _make_inputs(key, batch, in_features, out_features):
    k = jax.random.split(key, 7)
    x = jax.random.normal(k[0], (batch, in_features), dtype=jnp.float32)
    # deterministic parameter init mirroring the module's __init__ ranges
    weight_mu = jax.random.uniform(k[1], (out_features, in_features),
                                   minval=-0.2, maxval=0.2, dtype=jnp.float32)
    weight_rho = jax.random.uniform(k[2], (out_features, in_features),
                                    minval=-5.0, maxval=-4.0, dtype=jnp.float32)
    bias_mu = jax.random.uniform(k[3], (out_features,),
                                 minval=-0.2, maxval=0.2, dtype=jnp.float32)
    bias_rho = jax.random.uniform(k[4], (out_features,),
                                  minval=-5.0, maxval=-4.0, dtype=jnp.float32)
    # epsilon draws (the Normal(0,1).sample() in Gaussian.sample), generated host-side
    weight_eps = jax.random.normal(k[5], (out_features, in_features), dtype=jnp.float32)
    bias_eps = jax.random.normal(k[6], (out_features,), dtype=jnp.float32)
    return x, weight_mu, weight_rho, weight_eps, bias_mu, bias_rho, bias_eps


if __name__ == "__main__":
    key = jax.random.PRNGKey(0)
    k1, k2 = jax.random.split(key)

    # --- toy module shapes: grid collapses to (1, 1) ---
    args = _make_inputs(k1, batch=8, in_features=32, out_features=16)
    y, lp, lvp = bayesian_linear_forward(*args)
    jax.block_until_ready((y, lp, lvp))
    y_ref, lp_ref, lvp_ref = _reference_forward(*args)
    assert jnp.allclose(y, y_ref, atol=1e-4, rtol=1e-4)
    assert jnp.allclose(lp, lp_ref, atol=1e-2, rtol=2e-4)
    assert jnp.allclose(lvp, lvp_ref, atol=1e-2, rtol=2e-4)

    # --- exercise the tiled path: grid (2, 2) = parallel out-tiles x K reduction ---
    args = _make_inputs(k2, batch=8, in_features=256, out_features=256)
    y, lp, lvp = bayesian_linear_forward(*args, block_out=128, block_k=128)
    jax.block_until_ready((y, lp, lvp))
    y_ref, lp_ref, lvp_ref = _reference_forward(*args)
    assert jnp.allclose(y, y_ref, atol=1e-4, rtol=1e-4)
    assert jnp.allclose(lp, lp_ref, atol=1e-1, rtol=2e-4)
    assert jnp.allclose(lvp, lvp_ref, atol=1e-1, rtol=2e-4)

    # --- inference-style call without log-prob math ---
    y2, lp0, lvp0 = bayesian_linear_forward(*args, block_out=128, block_k=128,
                                            compute_log_probs=False)
    jax.block_until_ready((y2, lp0, lvp0))
    assert jnp.allclose(y2, y_ref, atol=1e-4, rtol=1e-4)
    assert float(lp0) == 0.0 and float(lvp0) == 0.0

    print("KERNEL_OK")
</pallas_src>

<mosaic_0001>
module attributes {stable_mosaic.version = 11 : i64} {
  func.func @_bayesian_linear_kernel(%arg0: i32, %arg1: i32, %arg2: memref<8x32xf32, #tpu.memory_space<vmem>>, %arg3: memref<16x32xf32, #tpu.memory_space<vmem>>, %arg4: memref<16x32xf32, #tpu.memory_space<vmem>>, %arg5: memref<16x32xf32, #tpu.memory_space<vmem>>, %arg6: memref<1x16xf32, #tpu.memory_space<vmem>>, %arg7: memref<1x16xf32, #tpu.memory_space<vmem>>, %arg8: memref<1x16xf32, #tpu.memory_space<vmem>>, %arg9: memref<8x16xf32, #tpu.memory_space<vmem>>, %arg10: memref<1x8x128xf32, #tpu.memory_space<vmem>>, %arg11: memref<8x16xf32, #tpu.memory_space<vmem>>, %arg12: memref<2xf32, #tpu.memory_space<smem>>) attributes {dimension_semantics = [#tpu.dimension_semantics<parallel>, #tpu.dimension_semantics<arbitrary>], iteration_bounds = array<i64: 1, 1>, scalar_prefetch = 0 : i64, scratch_operands = 2 : i64, tpu.core_type = #tpu.core_type<tc>, window_params = [{transform_indices = @transform_0, window_bounds = array<i64: 8, 32>}, {transform_indices = @transform_1, window_bounds = array<i64: 16, 32>}, {transform_indices = @transform_2, window_bounds = array<i64: 16, 32>}, {transform_indices = @transform_3, window_bounds = array<i64: 16, 32>}, {transform_indices = @transform_4, window_bounds = array<i64: 1, 16>}, {transform_indices = @transform_5, window_bounds = array<i64: 1, 16>}, {transform_indices = @transform_6, window_bounds = array<i64: 1, 16>}, {transform_indices = @transform_7, window_bounds = array<i64: 8, 16>}, {transform_indices = @transform_8, window_bounds = array<i64: 1, 8, 128>}]} {
    %c0_i32 = arith.constant 0 : i32
    %0 = arith.cmpi eq, %arg1, %c0_i32 : i32
    %1 = arith.extui %0 : i1 to i32
    %c0_i32_0 = arith.constant 0 : i32
    %2 = arith.cmpi ne, %1, %c0_i32_0 : i32
    scf.if %2 {
      %c0_27 = arith.constant 0 : index
      %c0_28 = arith.constant 0 : index
      %59 = vector.load %arg7[%c0_27, %c0_28] : memref<1x16xf32, #tpu.memory_space<vmem>>, vector<1x16xf32>
      %cst_29 = arith.constant 0.000000e+00 : f32
      %60 = vector.broadcast %cst_29 : f32 to vector<1x16xf32>
      %61 = arith.maximumf %59, %60 : vector<1x16xf32>
      %62 = math.absf %59 : vector<1x16xf32>
      %cst_30 = arith.constant 0.000000e+00 : f32
      %63 = vector.broadcast %cst_30 : f32 to vector<1x16xf32>
      %64 = arith.subf %63, %62 : vector<1x16xf32>
      %65 = math.exp %64 : vector<1x16xf32>
      %66 = math.log1p %65 : vector<1x16xf32>
      %67 = arith.addf %61, %66 : vector<1x16xf32>
      %c0_31 = arith.constant 0 : index
      %c0_32 = arith.constant 0 : index
      %68 = vector.load %arg8[%c0_31, %c0_32] : memref<1x16xf32, #tpu.memory_space<vmem>>, vector<1x16xf32>
      %c0_33 = arith.constant 0 : index
      %c0_34 = arith.constant 0 : index
      %69 = vector.load %arg6[%c0_33, %c0_34] : memref<1x16xf32, #tpu.memory_space<vmem>>, vector<1x16xf32>
      %70 = arith.mulf %67, %68 : vector<1x16xf32>
      %71 = arith.addf %69, %70 : vector<1x16xf32>
      %72 = vector.shape_cast %71 : vector<1x16xf32> to vector<1x16xf32>
      %73 = vector.broadcast %72 : vector<1x16xf32> to vector<8x16xf32>
      %c0_35 = arith.constant 0 : index
      %c0_36 = arith.constant 0 : index
      %74 = vector.load %arg11[%c0_35, %c0_36] : memref<8x16xf32, #tpu.memory_space<vmem>>, vector<8x16xf32>
      tpu.vector_store %arg11[%c0_35, %c0_36], %73 {strides = array<i32>} : memref<8x16xf32, #tpu.memory_space<vmem>>, vector<8x16xf32>,
      %75 = arith.mulf %71, %71 : vector<1x16xf32>
      %cst_37 = arith.constant 5.000000e-01 : f32
      %76 = vector.broadcast %cst_37 : f32 to vector<1x16xf32>
      %77 = arith.mulf %76, %75 : vector<1x16xf32>
      %cst_38 = arith.constant -1.6120857 : f32
      %78 = vector.broadcast %cst_38 : f32 to vector<1x16xf32>
      %79 = arith.subf %78, %77 : vector<1x16xf32>
      %cst_39 = arith.constant 81377.3984 : f32
      %80 = vector.broadcast %cst_39 : f32 to vector<1x16xf32>
      %81 = arith.mulf %80, %75 : vector<1x16xf32>
      %cst_40 = arith.constant 4.38791418 : f32
      %82 = vector.broadcast %cst_40 : f32 to vector<1x16xf32>
      %83 = arith.subf %82, %81 : vector<1x16xf32>
      %84 = arith.maximumf %79, %83 : vector<1x16xf32>
      %85 = arith.minimumf %79, %83 : vector<1x16xf32>
      %86 = arith.subf %85, %84 : vector<1x16xf32>
      %87 = math.exp %86 : vector<1x16xf32>
      %88 = math.log1p %87 : vector<1x16xf32>
      %89 = arith.addf %84, %88 : vector<1x16xf32>
      %90 = vector.shape_cast %89 : vector<1x16xf32> to vector<1x1x16xf32>
      %cst_41 = arith.constant dense<0.000000e+00> : vector<1xf32>
      %91 = vector.multi_reduction <add>, %90, %cst_41 [1, 2] : vector<1x1x16xf32> to vector<1xf32>
      %92 = vector.shape_cast %91 : vector<1xf32> to vector<1x1x1xf32>
      %93 = vector.extract %92[0, 0, 0] : f32 from vector<1x1x1xf32>
      %c0_42 = arith.constant 0 : index
      %94 = memref.load %arg12[%c0_42] : memref<2xf32, #tpu.memory_space<smem>>
      memref.store %93, %arg12[%c0_42] : memref<2xf32, #tpu.memory_space<smem>>
      %95 = math.log %67 : vector<1x16xf32>
      %96 = arith.mulf %68, %68 : vector<1x16xf32>
      %cst_43 = arith.constant 5.000000e-01 : f32
      %97 = vector.broadcast %cst_43 : f32 to vector<1x16xf32>
      %98 = arith.mulf %97, %96 : vector<1x16xf32>
      %99 = arith.addf %95, %98 : vector<1x16xf32>
      %100 = vector.shape_cast %99 : vector<1x16xf32> to vector<1x1x16xf32>
      %cst_44 = arith.constant dense<0.000000e+00> : vector<1xf32>
      %101 = vector.multi_reduction <add>, %100, %cst_44 [1, 2] : vector<1x1x16xf32> to vector<1xf32>
      %102 = vector.shape_cast %101 : vector<1xf32> to vector<1x1x1xf32>
      %103 = vector.extract %102[0, 0, 0] : f32 from vector<1x1x1xf32>
      %cst_45 = arith.constant -14.7030163 : f32
      %104 = arith.subf %cst_45, %103 : f32
      %c1_46 = arith.constant 1 : index
      %105 = memref.load %arg12[%c1_46] : memref<2xf32, #tpu.memory_space<smem>>
      memref.store %104, %arg12[%c1_46] : memref<2xf32, #tpu.memory_space<smem>>
    } else {
    }
    %c0 = arith.constant 0 : index
    %c0_1 = arith.constant 0 : index
    %3 = vector.load %arg5[%c0, %c0_1] : memref<16x32xf32, #tpu.memory_space<vmem>>, vector<16x32xf32>
    %c0_2 = arith.constant 0 : index
    %c0_3 = arith.constant 0 : index
    %4 = vector.load %arg4[%c0_2, %c0_3] : memref<16x32xf32, #tpu.memory_space<vmem>>, vector<16x32xf32>
    %cst = arith.constant 0.000000e+00 : f32
    %5 = vector.broadcast %cst : f32 to vector<16x32xf32>
    %6 = arith.maximumf %4, %5 : vector<16x32xf32>
    %7 = math.absf %4 : vector<16x32xf32>
    %cst_4 = arith.constant 0.000000e+00 : f32
    %8 = vector.broadcast %cst_4 : f32 to vector<16x32xf32>
    %9 = arith.subf %8, %7 : vector<16x32xf32>
    %10 = math.exp %9 : vector<16x32xf32>
    %11 = math.log1p %10 : vector<16x32xf32>
    %12 = arith.addf %6, %11 : vector<16x32xf32>
    %c0_5 = arith.constant 0 : index
    %c0_6 = arith.constant 0 : index
    %13 = vector.load %arg3[%c0_5, %c0_6] : memref<16x32xf32, #tpu.memory_space<vmem>>, vector<16x32xf32>
    %14 = arith.mulf %12, %3 : vector<16x32xf32>
    %15 = arith.addf %13, %14 : vector<16x32xf32>
    %c0_7 = arith.constant 0 : index
    %c0_8 = arith.constant 0 : index
    %16 = vector.load %arg11[%c0_7, %c0_8] : memref<8x16xf32, #tpu.memory_space<vmem>>, vector<8x16xf32>
    %c0_9 = arith.constant 0 : index
    %c0_10 = arith.constant 0 : index
    %17 = vector.load %arg2[%c0_9, %c0_10] : memref<8x32xf32, #tpu.memory_space<vmem>>, vector<8x32xf32>
    %cst_11 = arith.constant dense<0.000000e+00> : vector<8x16xf32>
    %18 = tpu.matmul %17, %15, %cst_11 {dimension_numbers = #tpu.dot_dimension_numbers<[1], [1], [0], [0], [0, 0, 1, 0], [], []>} : vector<8x32xf32>, vector<16x32xf32>, vector<8x16xf32> -> vector<8x16xf32>
    %19 = arith.addf %16, %18 : vector<8x16xf32>
    %c0_12 = arith.constant 0 : index
    %c0_13 = arith.constant 0 : index
    %20 = vector.load %arg11[%c0_12, %c0_13] : memref<8x16xf32, #tpu.memory_space<vmem>>, vector<8x16xf32>
    tpu.vector_store %arg11[%c0_12, %c0_13], %19 {strides = array<i32>} : memref<8x16xf32, #tpu.memory_space<vmem>>, vector<8x16xf32>,
    %c1 = arith.constant 1 : index
    %21 = memref.load %arg12[%c1] : memref<2xf32, #tpu.memory_space<smem>>
    %22 = math.log %12 : vector<16x32xf32>
    %23 = arith.mulf %3, %3 : vector<16x32xf32>
    %cst_14 = arith.constant 5.000000e-01 : f32
    %24 = vector.broadcast %cst_14 : f32 to vector<16x32xf32>
    %25 = arith.mulf %24, %23 : vector<16x32xf32>
    %26 = arith.addf %22, %25 : vector<16x32xf32>
    %27 = vector.shape_cast %26 : vector<16x32xf32> to vector<1x16x32xf32>
    %cst_15 = arith.constant dense<0.000000e+00> : vector<1xf32>
    %28 = vector.multi_reduction <add>, %27, %cst_15 [1, 2] : vector<1x16x32xf32> to vector<1xf32>
    %29 = vector.shape_cast %28 : vector<1xf32> to vector<1x1x1xf32>
    %30 = vector.extract %29[0, 0, 0] : f32 from vector<1x1x1xf32>
    %cst_16 = arith.constant -470.496521 : f32
    %31 = arith.subf %cst_16, %30 : f32
    %32 = arith.addf %21, %31 : f32
    %c1_17 = arith.constant 1 : index
    %33 = memref.load %arg12[%c1_17] : memref<2xf32, #tpu.memory_space<smem>>
    memref.store %32, %arg12[%c1_17] : memref<2xf32, #tpu.memory_space<smem>>
    %c0_18 = arith.constant 0 : index
    %34 = memref.load %arg12[%c0_18] : memref<2xf32, #tpu.memory_space<smem>>
    %35 = arith.mulf %15, %15 : vector<16x32xf32>
    %cst_19 = arith.constant 5.000000e-01 : f32
    %36 = vector.broadcast %cst_19 : f32 to vector<16x32xf32>
    %37 = arith.mulf %36, %35 : vector<16x32xf32>
    %cst_20 = arith.constant -1.6120857 : f32
    %38 = vector.broadcast %cst_20 : f32 to vector<16x32xf32>
    %39 = arith.subf %38, %37 : vector<16x32xf32>
    %cst_21 = arith.constant 81377.3984 : f32
    %40 = vector.broadcast %cst_21 : f32 to vector<16x32xf32>
    %41 = arith.mulf %40, %35 : vector<16x32xf32>
    %cst_22 = arith.constant 4.38791418 : f32
    %42 = vector.broadcast %cst_22 : f32 to vector<16x32xf32>
    %43 = arith.subf %42, %41 : vector<16x32xf32>
    %44 = arith.maximumf %39, %43 : vector<16x32xf32>
    %45 = arith.minimumf %39, %43 : vector<16x32xf32>
    %46 = arith.subf %45, %44 : vector<16x32xf32>
    %47 = math.exp %46 : vector<16x32xf32>
    %48 = math.log1p %47 : vector<16x32xf32>
    %49 = arith.addf %44, %48 : vector<16x32xf32>
    %50 = vector.shape_cast %49 : vector<16x32xf32> to vector<1x16x32xf32>
    %cst_23 = arith.constant dense<0.000000e+00> : vector<1xf32>
    %51 = vector.multi_reduction <add>, %50, %cst_23 [1, 2] : vector<1x16x32xf32> to vector<1xf32>
    %52 = vector.shape_cast %51 : vector<1xf32> to vector<1x1x1xf32>
    %53 = vector.extract %52[0, 0, 0] : f32 from vector<1x1x1xf32>
    %54 = arith.addf %34, %53 : f32
    %c0_24 = arith.constant 0 : index
    %55 = memref.load %arg12[%c0_24] : memref<2xf32, #tpu.memory_space<smem>>
    memref.store %54, %arg12[%c0_24] : memref<2xf32, #tpu.memory_space<smem>>
    %c0_i32_25 = arith.constant 0 : i32
    %56 = arith.cmpi eq, %arg1, %c0_i32_25 : i32
    %57 = arith.extui %56 : i1 to i32
    %c0_i32_26 = arith.constant 0 : i32
    %58 = arith.cmpi ne, %57, %c0_i32_26 : i32
    scf.if %58 {
      %c0_27 = arith.constant 0 : index
      %c0_28 = arith.constant 0 : index
      %59 = vector.load %arg11[%c0_27, %c0_28] : memref<8x16xf32, #tpu.memory_space<vmem>>, vector<8x16xf32>
      %c0_29 = arith.constant 0 : index
      %c0_30 = arith.constant 0 : index
      %60 = vector.load %arg9[%c0_29, %c0_30] : memref<8x16xf32, #tpu.memory_space<vmem>>, vector<8x16xf32>
      tpu.vector_store %arg9[%c0_29, %c0_30], %59 {strides = array<i32>} : memref<8x16xf32, #tpu.memory_space<vmem>>, vector<8x16xf32>,
      %61 = tpu.iota {dimensions = array<i32: 0>} : vector<8x128xi32>
      %c0_i32_31 = arith.constant 0 : i32
      %62 = vector.broadcast %c0_i32_31 : i32 to vector<8x128xi32>
      %63 = arith.cmpi eq, %61, %62 : vector<8x128xi32>
      %c0_32 = arith.constant 0 : index
      %64 = memref.load %arg12[%c0_32] : memref<2xf32, #tpu.memory_space<smem>>
      %c1_i32 = arith.constant 1 : i32
      %65 = vector.broadcast %c1_i32 : i32 to vector<8x128xi32>
      %66 = arith.cmpi eq, %61, %65 : vector<8x128xi32>
      %c1_33 = arith.constant 1 : index
      %67 = memref.load %arg12[%c1_33] : memref<2xf32, #tpu.memory_space<smem>>
      %cst_34 = arith.constant 0.000000e+00 : f32
      %68 = vector.broadcast %67 : f32 to vector<8x128xf32>
      %69 = vector.broadcast %cst_34 : f32 to vector<8x128xf32>
      %70 = arith.select %66, %68, %69 : vector<8x128xi1>, vector<8x128xf32>
      %71 = vector.broadcast %64 : f32 to vector<8x128xf32>
      %72 = arith.select %63, %71, %70 : vector<8x128xi1>, vector<8x128xf32>
      %c0_35 = arith.constant 0 : index
      %c0_36 = arith.constant 0 : index
      %c0_37 = arith.constant 0 : index
      %73 = vector.load %arg10[%c0_35, %c0_36, %c0_37] : memref<1x8x128xf32, #tpu.memory_space<vmem>>, vector<1x8x128xf32>
      %74 = vector.shape_cast %73 : vector<1x8x128xf32> to vector<8x128xf32>
      %75 = vector.shape_cast %72 : vector<8x128xf32> to vector<1x8x128xf32>
      tpu.vector_store %arg10[%c0_35, %c0_36, %c0_37], %75 {strides = array<i32>} : memref<1x8x128xf32, #tpu.memory_space<vmem>>, vector<1x8x128xf32>,
    } else {
    }
    return
  }
  func.func @transform_0(%arg0: i32, %arg1: i32) -> (i32, i32) {
    %c0_i32 = arith.constant 0 : i32
    %c0_i32_0 = arith.constant 0 : i32
    return %c0_i32, %arg1 : i32, i32
  }
  func.func @transform_1(%arg0: i32, %arg1: i32) -> (i32, i32) {
    %c0_i32 = arith.constant 0 : i32
    return %arg0, %arg1 : i32, i32
  }
  func.func @transform_2(%arg0: i32, %arg1: i32) -> (i32, i32) {
    %c0_i32 = arith.constant 0 : i32
    return %arg0, %arg1 : i32, i32
  }
  func.func @transform_3(%arg0: i32, %arg1: i32) -> (i32, i32) {
    %c0_i32 = arith.constant 0 : i32
    return %arg0, %arg1 : i32, i32
  }
  func.func @transform_4(%arg0: i32, %arg1: i32) -> (i32, i32) {
    %c0_i32 = arith.constant 0 : i32
    %c0_i32_0 = arith.constant 0 : i32
    return %c0_i32, %arg0 : i32, i32
  }
  func.func @transform_5(%arg0: i32, %arg1: i32) -> (i32, i32) {
    %c0_i32 = arith.constant 0 : i32
    %c0_i32_0 = arith.constant 0 : i32
    return %c0_i32, %arg0 : i32, i32
  }
  func.func @transform_6(%arg0: i32, %arg1: i32) -> (i32, i32) {
    %c0_i32 = arith.constant 0 : i32
    %c0_i32_0 = arith.constant 0 : i32
    return %c0_i32, %arg0 : i32, i32
  }
  func.func @transform_7(%arg0: i32, %arg1: i32) -> (i32, i32) {
    %c0_i32 = arith.constant 0 : i32
    %c0_i32_0 = arith.constant 0 : i32
    return %c0_i32, %arg0 : i32, i32
  }
  func.func @transform_8(%arg0: i32, %arg1: i32) -> (i32, i32, i32) {
    %c0_i32 = arith.constant 0 : i32
    %c0_i32_0 = arith.constant 0 : i32
    %c0_i32_1 = arith.constant 0 : i32
    return %arg0, %c0_i32, %c0_i32_0 : i32, i32, i32
  }
}

</mosaic_0001>

<llo_original>
// kernel: tpu_custom_call.1
$region0: #{tpu_custom_call.1}
  #allocation0 [shape = 'u32[]', space=smem, size = 0x4, offset = 0x4, fixed_abs, tag = 'smem constant byte address 0x4 - core index']
  #allocation1 [shape = 'u32[144,128]{1,0:T(1,128)}', space=vmem, size = 0x12000, scoped, tag = 'internal scratch']
  #allocation2 [shape = 'f32[8,16]{1,0:T(8,128)}', space=vmem, size = 0x1000, scoped, tag = 'scratch operand']
  #allocation3 [shape = 'f32[2]{0:T(128)}', space=smem, size = 0x200, scoped, tag = 'scratch operand']
  %s0 = inlined_call_operand.hbm [shape: f32[8,32], index: 0, kind: input, shape index: {}]
  %s1 = inlined_call_operand.hbm [shape: f32[16,32], index: 1, kind: input, shape index: {}]
  %s2 = inlined_call_operand.hbm [shape: f32[16,32], index: 2, kind: input, shape index: {}]
  %s3 = inlined_call_operand.hbm [shape: f32[16,32], index: 3, kind: input, shape index: {}]
  %s4 = inlined_call_operand.vmem [shape: f32[1,16], index: 4, kind: input, shape index: {}]
  %s5 = inlined_call_operand.vmem [shape: f32[1,16], index: 5, kind: input, shape index: {}]
  %s6 = inlined_call_operand.vmem [shape: f32[1,16], index: 6, kind: input, shape index: {}]
  %s7 = inlined_call_operand.hbm [shape: f32[8,16], index: 7, kind: output, shape index: {0}]
  %s8 = inlined_call_operand.hbm [shape: f32[1,8,128], index: 8, kind: output, shape index: {1}]
  %9 = xla_tuple %s7, %s8
  %s10 = sld [smem:[#allocation0]]
  $region70: #{tpu_custom_call.1} parent=0
    _
  %s12 = ssub.s32 1, %s10
  %s13 = scalar_select 0, %s12, %s10
  $region1: #{tpu_custom_call.1} parent=0
    #allocation4 [shape = 'u8[4096]{0}', space=vmem, size = 0x1000, scoped, tag = 'input window, operand 0, single buffered']
    #allocation5 [shape = 's32[1]{0}', space=sflag, size = 0x4, scoped, tag = 'scoped memory for tpu_custom_call.1']
    #allocation6 [shape = 's32[1]{0}', space=sflag, size = 0x4, scoped, tag = 'scoped memory for tpu_custom_call.1']
    #allocation7 [shape = 'u8[8192]{0}', space=vmem, size = 0x2000, scoped, tag = 'input window, operand 1, single buffered']
    #allocation8 [shape = 's32[1]{0}', space=sflag, size = 0x4, scoped, tag = 'scoped memory for tpu_custom_call.1']
    #allocation9 [shape = 'u8[8192]{0}', space=vmem, size = 0x2000, scoped, tag = 'input window, operand 2, single buffered']
    #allocation10 [shape = 'u8[8192]{0}', space=vmem, size = 0x2000, scoped, tag = 'input window, operand 3, single buffered']
    #allocation11 [shape = 's32[1]{0}', space=sflag, size = 0x4, scoped, tag = 'scoped memory for tpu_custom_call.1']
    #allocation12 [shape = 'u8[4096]{0}', space=vmem, size = 0x1000, scoped, tag = 'output window, operand 0, single buffered']
    #allocation13 [shape = 'u8[4096]{0}', space=vmem, size = 0x1000, scoped, tag = 'output window, operand 1, single buffered']
    #allocation14 [shape = 's32[1]{0}', space=sflag, size = 0x4, scoped, tag = 'scoped memory for tpu_custom_call.1']
    %14 = vsyncpa [#allocation5], 0
    %15 = vsyncpa [#allocation8], 0
    %16 = vsyncpa [#allocation11], 0
    %17 = vsyncpa [#allocation6], 0
    %18 = vsyncpa [#allocation14], 0
    // Predicated region
    $region2: #{tpu_custom_call.1} parent=1 // pred_check
      _
    $region3: #{tpu_custom_call.1} parent=1 // pred_check_branch
      %20 = sbr.rel (0) target = $region5
    $region4: #{tpu_custom_call.1} parent=1 // pred_region
      %s22 = ssub.s32 128, 128
      %23 = vsyncadd [#allocation5], %s22
      %s25 = sshll.u32 [#allocation4], 4
      %s26 = int_to_ptr.vmem [resolvable:$true] %s25
      %28 = dma.hbm_to_vmem [thread:$0]  %s0, 128, %s26, [#allocation5]
    $region5: #{tpu_custom_call.1} parent=1 // pred_fallthru
      _
    // Predicated region
    $region6: #{tpu_custom_call.1} parent=1 // pred_check
      _
    $region7: #{tpu_custom_call.1} parent=1 // pred_check_branch
      %30 = sbr.rel (0) target = $region9
    $region8: #{tpu_custom_call.1} parent=1 // pred_region
      %s32 = ssub.s32 256, 256
      %33 = vsyncadd [#allocation8], %s32
      %s34 = sshll.u32 [#allocation7], 4
      %s35 = int_to_ptr.vmem [resolvable:$true] %s34
      %40 = dma.hbm_to_vmem [thread:$0]  %s1, 256, %s35, [#allocation8], 128, 128, 8
    $region9: #{tpu_custom_call.1} parent=1 // pred_fallthru
      _
    // Predicated region
    $region10: #{tpu_custom_call.1} parent=1 // pred_check
      _
    $region11: #{tpu_custom_call.1} parent=1 // pred_check_branch
      %42 = sbr.rel (0) target = $region13
    $region12: #{tpu_custom_call.1} parent=1 // pred_region
      %s44 = ssub.s32 256, 256
      %45 = vsyncadd [#allocation8], %s44
      %s46 = sshll.u32 [#allocation9], 4
      %s47 = int_to_ptr.vmem [resolvable:$true] %s46
      %52 = dma.hbm_to_vmem [thread:$0]  %s2, 256, %s47, [#allocation8], 128, 128, 8
    $region13: #{tpu_custom_call.1} parent=1 // pred_fallthru
      _
    // Predicated region
    $region14: #{tpu_custom_call.1} parent=1 // pred_check
      _
    $region15: #{tpu_custom_call.1} parent=1 // pred_check_branch
      %54 = sbr.rel (0) target = $region17
    $region16: #{tpu_custom_call.1} parent=1 // pred_region
      %s56 = ssub.s32 256, 256
      %57 = vsyncadd [#allocation11], %s56
      %s58 = sshll.u32 [#allocation10], 4
      %s59 = int_to_ptr.vmem [resolvable:$true] %s58
      %64 = dma.hbm_to_vmem [thread:$0]  %s3, 256, %s59, [#allocation11], 128, 128, 8
    $region17: #{tpu_custom_call.1} parent=1 // pred_fallthru
      _
    // Predicated region
    $region18: #{tpu_custom_call.1} parent=1 // pred_check
      _
    $region19: #{tpu_custom_call.1} parent=1 // pred_check_branch
      %66 = sbr.rel (0) target = $region21
    $region20: #{tpu_custom_call.1} parent=1 // pred_region
      _
    $region21: #{tpu_custom_call.1} parent=1 // pred_fallthru
      _
    // Predicated region
    $region22: #{tpu_custom_call.1} parent=1 // pred_check
      _
    $region23: #{tpu_custom_call.1} parent=1 // pred_check_branch
      %68 = sbr.rel (0) target = $region25
    $region24: #{tpu_custom_call.1} parent=1 // pred_region
      _
    $region25: #{tpu_custom_call.1} parent=1 // pred_fallthru
      _
    // Predicated region
    $region26: #{tpu_custom_call.1} parent=1 // pred_check
      _
    $region27: #{tpu_custom_call.1} parent=1 // pred_check_branch
      %70 = sbr.rel (0) target = $region29
    $region28: #{tpu_custom_call.1} parent=1 // pred_region
      _
    $region29: #{tpu_custom_call.1} parent=1 // pred_fallthru
      _
    // Predicated region
    $region30: #{tpu_custom_call.1} parent=1 // pred_check
      _
    $region31: #{tpu_custom_call.1} parent=1 // pred_check_branch
      %72 = sbr.rel (0) target = $region33
    $region32: #{tpu_custom_call.1} parent=1 // pred_region
      %73 = dma.done [#allocation5], 128
    $region33: #{tpu_custom_call.1} parent=1 // pred_fallthru
      _
    // Predicated region
    $region34: #{tpu_custom_call.1} parent=1 // pred_check
      _
    $region35: #{tpu_custom_call.1} parent=1 // pred_check_branch
      %75 = sbr.rel (0) target = $region37
    $region36: #{tpu_custom_call.1} parent=1 // pred_region
      %76 = dma.done [#allocation8], 256
    $region37: #{tpu_custom_call.1} parent=1 // pred_fallthru
      _
    // Predicated region
    $region38: #{tpu_custom_call.1} parent=1 // pred_check
      _
    $region39: #{tpu_custom_call.1} parent=1 // pred_check_branch
      %78 = sbr.rel (0) target = $region41
    $region40: #{tpu_custom_call.1} parent=1 // pred_region
      %79 = dma.done [#allocation8], 256
    $region41: #{tpu_custom_call.1} parent=1 // pred_fallthru
      _
    // Predicated region
    $region42: #{tpu_custom_call.1} parent=1 // pred_check
      _
    $region43: #{tpu_custom_call.1} parent=1 // pred_check_branch
      %81 = sbr.rel (0) target = $region45
    $region44: #{tpu_custom_call.1} parent=1 // pred_region
      %82 = dma.done [#allocation11], 256
    $region45: #{tpu_custom_call.1} parent=1 // pred_fallthru
      _
    %p83 = scmp.eq.s32.totalorder 0, 0
    // Predicated region
    $region46: #{tpu_custom_call.1} parent=1 // pred_check
      %p84 = pneg %p83
    $region47: #{tpu_custom_call.1} parent=1 // pred_check_branch
      %86 = sbr.rel (%p84) target = $region49
    $region48: #{tpu_custom_call.1} parent=1 // pred_region
      %v87 = vld [vmem:[%s5] sm:$0x1]
      %v88 = vmax.f32 %v87, 0.0
      %v89 = vand.u32 2147483647, %v87
      %v90 = vsub.f32 0.0, %v89
      %v91 = vmul.f32 %v90, 1.442695
      %v92 = vpow.pop %v91
      %v93 = vadd.f32 %v92, 1.0
      %v94 = vlog2.pop %v93
      %v95 = vmul.f32 %v94, 0.6931472
      %v96 = vmul.f32 -0.5, %v92
      %v97 = vadd.f32 %v96, 1.0
      %v98 = vmul.f32 %v97, %v92
      %v99 = vand.u32 2147483647, %v92
      %vm100 = vcmp.lt.f32.partialorder %v99, 0.0004427343
      %v101 = vsel %vm100, %v98, %v95
      %v102 = vadd.f32 %v88, %v101
      %v103 = vld [vmem:[%s6] sm:$0x1]
      %v104 = vld [vmem:[%s4] sm:$0x1]
      %v105 = vmul.f32 %v102, %v103
      %v106 = vadd.f32 %v104, %v105
      %v108 = vlaneseq
      %v109 = vshrl.u32 %v108, 7
      %v110 = vsub.s32 0, %v109
      %v111 = vrot.slane %v106, %v110
      %vm113 = vcmask 130048
      %114 = vst.msk [vmem:[#allocation2] sm:$0xff] %vm113, %v111
      %v115 = vmul.f32 %v106, %v106
      %v116 = vmul.f32 %v115, 0.5
      %v117 = vsub.f32 -1.6120857, %v116
      %v118 = vmul.f32 %v115, 81377.4
      %v119 = vsub.f32 4.387914, %v118
      %v120 = vmax.f32 %v117, %v119
      %v121 = vmin.f32 %v117, %v119
      %v122 = vsub.f32 %v121, %v120
      %v123 = vmul.f32 %v122, 1.442695
      %v124 = vpow.pop %v123
      %v125 = vadd.f32 %v124, 1.0
      %v126 = vlog2.pop %v125
      %v127 = vmul.f32 %v126, 0.6931472
      %v128 = vmul.f32 -0.5, %v124
      %v129 = vadd.f32 %v128, 1.0
      %v130 = vmul.f32 %v129, %v124
      %v131 = vand.u32 2147483647, %v124
      %vm132 = vcmp.lt.f32.partialorder %v131, 0.0004427343
      %v133 = vsel %vm132, %v130, %v127
      %v134 = vadd.f32 %v120, %v133
      %vm135 = vcmask 122880
      %v136 = vsel %vm135, %v134, 0.0
      %137 = vadd.xlane.f32.xlu0 %v136
      %v138 = vpop.xlane.xlu0 %137
      %v139 = vrot.slane %v138, 4
      %v140 = vadd.f32 %v138, %v139
      %v141 = vrot.slane %v140, 2
      %v142 = vadd.f32 %v140, %v141
      %v143 = vrot.slane %v142, 1
      %v144 = vadd.f32 %v142, %v143
      %s145 = vtos %v144
      %s146 = scalar_lea.smem [#allocation3], 0
      %147 = sst [smem:[%s146]] %s145
      %v148 = vlog2.pop %v102
      %v149 = vmul.f32 %v148, 0.6931472
      %v150 = vmul.f32 %v103, %v103
      %v151 = vmul.f32 %v150, 0.5
      %v152 = vadd.f32 %v149, %v151
      %v153 = vsel %vm135, %v152, 0.0
      %154 = vadd.xlane.f32.xlu0 %v153
      %v155 = vpop.xlane.xlu0 %154
      %v156 = vrot.slane %v155, 4
      %v157 = vadd.f32 %v155, %v156
      %v158 = vrot.slane %v157, 2
      %v159 = vadd.f32 %v157, %v158
      %v160 = vrot.slane %v159, 1
      %v161 = vadd.f32 %v159, %v160
      %s162 = vtos %v161
      %s163 = ssub.f32 -14.703016, %s162
      %s164 = scalar_lea.smem [#allocation3], 1
      %165 = sst [smem:[%s164]] %s163
    $region49: #{tpu_custom_call.1} parent=1 // pred_fallthru
      _
    %v166 = vld [vmem:[#allocation10] sm:$0xff]
    %v167 = vld [vmem:[#allocation10 + $0x8] sm:$0xff]
    %v168 = vld [vmem:[#allocation9] sm:$0xff]
    %v169 = vld [vmem:[#allocation9 + $0x8] sm:$0xff]
    %v170 = vmax.f32 %v168, 0.0
    %v171 = vmax.f32 %v169, 0.0
    %v172 = vand.u32 2147483647, %v168
    %v173 = vand.u32 2147483647, %v169
    %v174 = vsub.f32 0.0, %v172
    %v175 = vsub.f32 0.0, %v173
    %v176 = vmul.f32 %v174, 1.442695
    %v177 = vpow.pop %v176
    %v178 = vmul.f32 %v175, 1.442695
    %v179 = vpow.pop %v178
    %v180 = vadd.f32 %v177, 1.0
    %v181 = vlog2.pop %v180
    %v182 = vmul.f32 %v181, 0.6931472
    %v183 = vmul.f32 -0.5, %v177
    %v184 = vadd.f32 %v183, 1.0
    %v185 = vmul.f32 %v184, %v177
    %v186 = vand.u32 2147483647, %v177
    %vm187 = vcmp.lt.f32.partialorder %v186, 0.0004427343
    %v188 = vsel %vm187, %v185, %v182
    %v189 = vadd.f32 %v179, 1.0
    %v190 = vlog2.pop %v189
    %v191 = vmul.f32 %v190, 0.6931472
    %v192 = vmul.f32 -0.5, %v179
    %v193 = vadd.f32 %v192, 1.0
    %v194 = vmul.f32 %v193, %v179
    %v195 = vand.u32 2147483647, %v179
    %vm196 = vcmp.lt.f32.partialorder %v195, 0.0004427343
    %v197 = vsel %vm196, %v194, %v191
    %v198 = vadd.f32 %v170, %v188
    %v199 = vadd.f32 %v171, %v197
    %v200 = vld [vmem:[#allocation7] sm:$0xff]
    %v201 = vld [vmem:[#allocation7 + $0x8] sm:$0xff]
    %v202 = vmul.f32 %v198, %v166
    %v203 = vmul.f32 %v199, %v167
    %v204 = vadd.f32 %v200, %v202
    %v205 = vadd.f32 %v201, %v203
    %v206 = vld [vmem:[#allocation2] sm:$0xff]
    %v207 = vld [vmem:[#allocation4] sm:$0xff]
    %vm208 = vcmask 261120
    %v210 = vsel %vm208, %v207, 0
    %v213 = vsel %vm208, %v204, 0
    %v216 = vsel %vm208, %v205, 0
    %218 = vmatprep.subr.mxu0 0.0
    %219 = vmatpush1.xpose.msra.mxu0 %v213
    %220 = vmatprep.subr.mxu0 0.0
    %221 = vmatpush1.xpose.msra.mxu0 %v216
    %222 = vmatprep.subr.mxu0 0.0
    %223 = vmatpush1.xpose.msra.mxu0 0.0
    %224 = vmatprep.subr.mxu0 0.0
    %225 = vmatpush1.xpose.msra.mxu0 0.0
    %226 = vmatprep.subr.mxu0 0.0
    %227 = vmatpush1.xpose.msra.mxu0 0.0
    %228 = vmatprep.subr.mxu0 0.0
    %229 = vmatpush1.xpose.msra.mxu0 0.0
    %230 = vmatprep.subr.mxu0 0.0
    %231 = vmatpush1.xpose.msra.mxu0 0.0
    %232 = vmatprep.subr.mxu0 0.0
    %233 = vmatpush1.xpose.msra.mxu0 0.0
    %234 = vmatprep.subr.mxu0 0.0
    %235 = vmatpush1.xpose.msra.mxu0 0.0
    %236 = vmatprep.subr.mxu0 0.0
    %237 = vmatpush1.xpose.msra.mxu0 0.0
    %238 = vmatprep.subr.mxu0 0.0
    %239 = vmatpush1.xpose.msra.mxu0 0.0
    %240 = vmatprep.subr.mxu0 0.0
    %241 = vmatpush1.xpose.msra.mxu0 0.0
    %242 = vmatprep.subr.mxu0 0.0
    %243 = vmatpush1.xpose.msra.mxu0 0.0
    %244 = vmatprep.subr.mxu0 0.0
    %245 = vmatpush1.xpose.msra.mxu0 0.0
    %246 = vmatprep.subr.mxu0 0.0
    %247 = vmatpush1.xpose.msra.mxu0 0.0
    %248 = vmatprep.subr.mxu0 0.0
    %249 = vmatpush1.xpose.msra.mxu0 0.0
    %250 = vmatprep.subr.mxu0 0.0
    %251 = vmatpush1.xpose.msra.mxu0 0.0
    %252 = vmatprep.subr.mxu0 0.0
    %253 = vmatpush1.xpose.msra.mxu0 0.0
    %254 = vmatprep.subr.mxu0 0.0
    %255 = vmatpush1.xpose.msra.mxu0 0.0
    %256 = vmatprep.subr.mxu0 0.0
    %257 = vmatpush1.xpose.msra.mxu0 0.0
    %258 = vmatprep.subr.mxu0 0.0
    %259 = vmatpush1.xpose.msra.mxu0 0.0
    %260 = vmatprep.subr.mxu0 0.0
    %261 = vmatpush1.xpose.msra.mxu0 0.0
    %262 = vmatprep.subr.mxu0 0.0
    %263 = vmatpush1.xpose.msra.mxu0 0.0
    %264 = vmatprep.subr.mxu0 0.0
    %265 = vmatpush1.xpose.msra.mxu0 0.0
    %266 = vmatprep.subr.mxu0 0.0
    %267 = vmatpush1.xpose.msra.mxu0 0.0
    %268 = vmatprep.subr.mxu0 0.0
    %269 = vmatpush1.xpose.msra.mxu0 0.0
    %270 = vmatprep.subr.mxu0 0.0
    %271 = vmatpush1.xpose.msra.mxu0 0.0
    %272 = vmatprep.subr.mxu0 0.0
    %273 = vmatpush1.xpose.msra.mxu0 0.0
    %274 = vmatprep.subr.mxu0 0.0
    %275 = vmatpush1.xpose.msra.mxu0 0.0
    %276 = vmatprep.subr.mxu0 0.0
    %277 = vmatpush1.xpose.msra.mxu0 0.0
    %278 = vmatprep.subr.mxu0 0.0
    %279 = vmatpush1.xpose.msra.mxu0 0.0
    %280 = vmatprep.subr.mxu0 0.0
    %281 = vmatpush1.xpose.msra.mxu0 0.0
    %282 = vmatprep.mubr.f32.mxu0 0.0
    %283 = vmatmul.mubr.f32.gmra.mrb[0].mxu0 %v210
    %v284 = vpop.f32.mrb[0].mxu0
    %v285 = vadd.f32 0.0, %v284
    %v286 = vpop.f32.mrb[0].mxu0
    %287 = vdwg.mxu0
    %v288 = vadd.f32 %v206, %v285
    %vm289 = vcmask 130048
    %290 = vst.msk [vmem:[#allocation2] sm:$0xff] %vm289, %v288
    %s291 = sld [smem:[#allocation3 + $0x1]]
    %v292 = vlog2.pop %v198
    %v293 = vmul.f32 %v292, 0.6931472
    %v294 = vlog2.pop %v199
    %v295 = vmul.f32 %v294, 0.6931472
    %v296 = vmul.f32 %v166, %v166
    %v297 = vmul.f32 %v167, %v167
    %v298 = vmul.f32 %v296, 0.5
    %v299 = vmul.f32 %v297, 0.5
    %v300 = vadd.f32 %v293, %v298
    %v301 = vadd.f32 %v295, %v299
    %v302 = vsel %vm208, %v300, 0.0
    %v303 = vsel %vm208, %v301, 0.0
    %v304 = vadd.f32 %v302, %v303
    %305 = vadd.xlane.f32.xlu0 %v304
    %v306 = vpop.xlane.xlu0 %305
    %v307 = vrot.slane %v306, 4
    %v308 = vadd.f32 %v306, %v307
    %v309 = vrot.slane %v308, 2
    %v310 = vadd.f32 %v308, %v309
    %v311 = vrot.slane %v310, 1
    %v312 = vadd.f32 %v310, %v311
    %s313 = vtos %v312
    %s314 = ssub.f32 -470.49652, %s313
    %s315 = sadd.f32 %s291, %s314
    %s316 = scalar_lea.smem [#allocation3], 1
    %317 = sst [smem:[%s316]] %s315
    %s318 = sld [smem:[#allocation3]]
    %v319 = vmul.f32 %v204, %v204
    %v320 = vmul.f32 %v205, %v205
    %v321 = vmul.f32 %v319, 0.5
    %v322 = vmul.f32 %v320, 0.5
    %v323 = vsub.f32 -1.6120857, %v321
    %v324 = vsub.f32 -1.6120857, %v322
    %v325 = vmul.f32 %v319, 81377.4
    %v326 = vmul.f32 %v320, 81377.4
    %v327 = vsub.f32 4.387914, %v325
    %v328 = vsub.f32 4.387914, %v326
    %v329 = vmax.f32 %v323, %v327
    %v330 = vmax.f32 %v324, %v328
    %v331 = vmin.f32 %v323, %v327
    %v332 = vmin.f32 %v324, %v328
    %v333 = vsub.f32 %v331, %v329
    %v334 = vsub.f32 %v332, %v330
    %v335 = vmul.f32 %v333, 1.442695
    %v336 = vpow.pop %v335
    %v337 = vmul.f32 %v334, 1.442695
    %v338 = vpow.pop %v337
    %v339 = vadd.f32 %v336, 1.0
    %v340 = vlog2.pop %v339
    %v341 = vmul.f32 %v340, 0.6931472
    %v342 = vmul.f32 -0.5, %v336
    %v343 = vadd.f32 %v342, 1.0
    %v344 = vmul.f32 %v343, %v336
    %v345 = vand.u32 2147483647, %v336
    %vm346 = vcmp.lt.f32.partialorder %v345, 0.0004427343
    %v347 = vsel %vm346, %v344, %v341
    %v348 = vadd.f32 %v338, 1.0
    %v349 = vlog2.pop %v348
    %v350 = vmul.f32 %v349, 0.6931472
    %v351 = vmul.f32 -0.5, %v338
    %v352 = vadd.f32 %v351, 1.0
    %v353 = vmul.f32 %v352, %v338
    %v354 = vand.u32 2147483647, %v338
    %vm355 = vcmp.lt.f32.partialorder %v354, 0.0004427343
    %v356 = vsel %vm355, %v353, %v350
    %v357 = vadd.f32 %v329, %v347
    %v358 = vadd.f32 %v330, %v356
    %v359 = vsel %vm208, %v357, 0.0
    %v360 = vsel %vm208, %v358, 0.0
    %v361 = vadd.f32 %v359, %v360
    %362 = vadd.xlane.f32.xlu0 %v361
    %v363 = vpop.xlane.xlu0 %362
    %v364 = vrot.slane %v363, 4
    %v365 = vadd.f32 %v363, %v364
    %v366 = vrot.slane %v365, 2
    %v367 = vadd.f32 %v365, %v366
    %v368 = vrot.slane %v367, 1
    %v369 = vadd.f32 %v367, %v368
    %s370 = vtos %v369
    %s371 = sadd.f32 %s318, %s370
    %s372 = scalar_lea.smem [#allocation3], 0
    %373 = sst [smem:[%s372]] %s371
    // Predicated region
    $region50: #{tpu_custom_call.1} parent=1 // pred_check
      %p374 = pneg %p83
    $region51: #{tpu_custom_call.1} parent=1 // pred_check_branch
      %376 = sbr.rel (%p374) target = $region53
    $region52: #{tpu_custom_call.1} parent=1 // pred_region
      %v377 = vld [vmem:[#allocation2] sm:$0xff]
      %378 = vst.msk [vmem:[#allocation12] sm:$0xff] %vm289, %v377
      %v379 = vlaneseq
      %v380 = vshrl.u32 %v379, 7
      %vm381 = vcmp.eq.s32.totalorder %v380, 0
      %s382 = sld [smem:[#allocation3]]
      %vm383 = vcmp.eq.s32.totalorder %v380, 1
      %s384 = sld [smem:[#allocation3 + $0x1]]
      %v385 = vstv %s384
      %v386 = vsel %vm383, %v385, 0.0
      %v387 = vstv %s382
      %v388 = vsel %vm381, %v387, %v386
      %389 = vst [vmem:[#allocation13] sm:$0xff] %v388
    $region53: #{tpu_custom_call.1} parent=1 // pred_fallthru
      _
    // Predicated region
    $region54: #{tpu_custom_call.1} parent=1 // pred_check
      _
    $region55: #{tpu_custom_call.1} parent=1 // pred_check_branch
      %391 = sbr.rel (0) target = $region57
    $region56: #{tpu_custom_call.1} parent=1 // pred_region
      %s393 = ssub.s32 128, 128
      %394 = vsyncadd [#allocation6], %s393
      %s396 = sshll.u32 [#allocation12], 4
      %s397 = int_to_ptr.vmem [resolvable:$true] %s396
      %399 = dma.vmem_to_hbm [thread:$0]  %s397, 128, %s7, [#allocation6]
    $region57: #{tpu_custom_call.1} parent=1 // pred_fallthru
      _
    // Predicated region
    $region58: #{tpu_custom_call.1} parent=1 // pred_check
      _
    $region59: #{tpu_custom_call.1} parent=1 // pred_check_branch
      %401 = sbr.rel (0) target = $region61
    $region60: #{tpu_custom_call.1} parent=1 // pred_region
      %s403 = ssub.s32 128, 128
      %404 = vsyncadd [#allocation14], %s403
      %s406 = sshll.u32 [#allocation13], 4
      %s407 = int_to_ptr.vmem [resolvable:$true] %s406
      %409 = dma.vmem_to_hbm [thread:$0]  %s407, 128, %s8, [#allocation14]
    $region61: #{tpu_custom_call.1} parent=1 // pred_fallthru
      _
    // Predicated region
    $region62: #{tpu_custom_call.1} parent=1 // pred_check
      _
    $region63: #{tpu_custom_call.1} parent=1 // pred_check_branch
      %411 = sbr.rel (0) target = $region65
    $region64: #{tpu_custom_call.1} parent=1 // pred_region
      %412 = dma.done [#allocation6], 128
    $region65: #{tpu_custom_call.1} parent=1 // pred_fallthru
      _
    // Predicated region
    $region66: #{tpu_custom_call.1} parent=1 // pred_check
      _
    $region67: #{tpu_custom_call.1} parent=1 // pred_check_branch
      %414 = sbr.rel (0) target = $region69
    $region68: #{tpu_custom_call.1} parent=1 // pred_region
      %415 = dma.done [#allocation14], 128
    $region69: #{tpu_custom_call.1} parent=1 // pred_fallthru
      _
    %416 = vsyncpa [#allocation5], 1
    %417 = vsyncpa [#allocation8], 1
    %418 = vsyncpa [#allocation11], 1
    %419 = vsyncpa [#allocation6], 1
    %420 = vsyncpa [#allocation14], 1

</llo_original>
